<compile_context>
chip_gen: v7x
topology: tpu7x:2x2x1
jax: 0.10.0
libtpu: 0.0.40
codegen_flags: <defaults>
</compile_context>

<pallas_src>
import functools

import jax
import jax.numpy as jnp
from jax.experimental import pallas as pl
from jax.experimental.pallas import tpu as pltpu


def _round_up(v: int, m: int) -> int:
    return -(-v // m) * m


def _pick_tile(padded_dim: int, cap: int, align: int) -> int:
    """Largest multiple of `align` <= min(cap, padded_dim) dividing padded_dim."""
    t = max(align, (min(cap, padded_dim) // align) * align)
    while padded_dim % t != 0:
        t -= align
    return t


def _tpu_generation() -> str:
    try:
        kind = jax.devices()[0].device_kind.lower()
    except Exception:
        return "unknown"
    for tag in ("v7", "v6", "v5", "v4"):
        if tag in kind:
            return tag
    return "unknown"


def _mask_nxm(w_abs: jax.Array, n: int, m: int) -> jax.Array:
    """maskNxM: within each contiguous group of `n` along in_features keep the
    `m` largest-magnitude entries (1.0), zero the rest."""
    out_f, in_f = w_abs.shape
    assert in_f % n == 0, "in_features must be divisible by sparse_n"
    groups = w_abs.reshape(out_f, in_f // n, n)
    _, idx = jax.lax.top_k(groups, m)                      # (out, g, m)
    onehot = jax.nn.one_hot(idx, n, dtype=w_abs.dtype)     # (out, g, m, n)
    mask = jnp.clip(jnp.sum(onehot, axis=-2), 0.0, 1.0)    # (out, g, n)
    return mask.reshape(out_f, in_f)


def _fake_quant_codes(w: jax.Array, bits: int):
    """Per-tensor symmetric quantization -> (integer codes, scale)."""
    q = float(2 ** bits)
    s = 2.0 * jnp.max(jnp.abs(w)) / q
    s = jnp.where(s == 0.0, 1.0, s)                        # guard all-zero
    codes = jnp.clip(jnp.round(w / s), -q / 2.0, q / 2.0 - 1.0)
    return codes, s.astype(jnp.float32)


# ---------------------------------------------------------------------------
# Kernel: tiled int8-code matmul (int MXU on v5e/v6e, bf16 MXU elsewhere) with
# accumulator scratch and fused dequant+bias epilogue.
# ---------------------------------------------------------------------------
def _code_matmul_kernel(scale_ref,   # SMEM (1,)  combined dequant scale xs*ws
                        x_ref,       # VMEM (tm, tk)  int8 activation codes
                        w_ref,       # VMEM (tk, tn)  int8 weight codes (K,N)
                        b_ref,       # VMEM (1, tn)   f32 bias
                        o_ref,       # VMEM (tm, tn)  output
                        acc_ref,     # VMEM scratch (tm, tn) int32 or f32
                        *, mxu_int: bool):
    k = pl.program_id(2)

    @pl.when(k == 0)
    def _():
        acc_ref[...] = jnp.zeros_like(acc_ref)

    if mxu_int:
        # int8 x int8 -> int32 on the MXU (v5e / v6e). Codes are <= 2^7 in
        # magnitude so int32 accumulation is safe for K up to ~1.3e5.
        acc_ref[...] += jnp.dot(x_ref[...], w_ref[...],
                                preferred_element_type=jnp.int32)
    else:
        # v7x (no int MXU path) / fallback: int8-stored, bf16-computed. Codes
        # <= 2^7 are exact in bf16; the upcast is VPU work hidden under the MXU.
        acc_ref[...] += jnp.dot(x_ref[...].astype(jnp.bfloat16),
                                w_ref[...].astype(jnp.bfloat16),
                                preferred_element_type=jnp.float32)

    @pl.when(k == pl.num_programs(2) - 1)
    def _():
        o_ref[...] = (acc_ref[...].astype(jnp.float32) * scale_ref[0]
                      + b_ref[...]).astype(o_ref.dtype)


# ---------------------------------------------------------------------------
# Forward wrapper: one-shot activation quantization, padding, tiled pallas_call.
# ---------------------------------------------------------------------------
@functools.partial(jax.jit, static_argnums=(4, 5, 6, 7))
def _masked_fq_forward(x, wq_t, w_scale, bias2d,
                       out_features, a_bits, use_int_mxu, vmem_limit):
    lead = x.shape[:-1]
    in_features = x.shape[-1]
    x2d = x.reshape(-1, in_features)
    M = x2d.shape[0]
    Kp, Np = wq_t.shape                                   # already 128-padded

    # --- one-shot activation fake-quant (per-tensor, chunk_size=1) ---
    qa = float(2 ** a_bits)
    half_a = qa / 2.0
    xf = x2d.astype(jnp.float32)
    x_scale = 2.0 * jnp.max(jnp.abs(xf)) / qa
    x_scale = jnp.where(x_scale == 0.0, 1.0, x_scale)
    xq = jnp.clip(jnp.round(xf / x_scale), -half_a, half_a - 1.0).astype(jnp.int8)

    # --- tile policy (shapes are static under jit) ---
    Mp = _round_up(max(M, 1), 32)                         # int8 sublane-friendly
    tm = _pick_tile(Mp, 512, 32)
    tk = _pick_tile(Kp, 1024, 128)
    tn = _pick_tile(Np, 512, 128)
    # v7x has 2 TensorCores: avoid a 1x1 "parallel" grid when N can be split.
    if (Mp // tm) == 1 and (Np // tn) == 1 and Np >= 256:
        tn = _pick_tile(Np, Np // 2, 128)

    x_pad = jnp.pad(xq, ((0, Mp - M), (0, Kp - in_features)))

    # Combined dequant scale applied once in the epilogue.
    scale = (x_scale * w_scale).reshape(1).astype(jnp.float32)

    grid = (Mp // tm, Np // tn, Kp // tk)
    acc_dtype = jnp.int32 if use_int_mxu else jnp.float32
    kern = functools.partial(_code_matmul_kernel, mxu_int=use_int_mxu)

    out = pl.pallas_call(
        kern,
        out_shape=jax.ShapeDtypeStruct((Mp, Np), x.dtype),
        grid_spec=pltpu.PrefetchScalarGridSpec(
            num_scalar_prefetch=0,
            grid=grid,
            in_specs=[
                pl.BlockSpec(memory_space=pltpu.MemorySpace.SMEM),   # scale
                pl.BlockSpec((tm, tk), lambda i, j, k: (i, k)),       # x codes
                pl.BlockSpec((tk, tn), lambda i, j, k: (k, j)),       # W^T codes
                pl.BlockSpec((1, tn), lambda i, j, k: (0, j)),        # bias
            ],
            out_specs=pl.BlockSpec((tm, tn), lambda i, j, k: (i, j)),
            scratch_shapes=[pltpu.VMEM((tm, tn), acc_dtype)],
        ),
        compiler_params=pltpu.CompilerParams(
            dimension_semantics=("parallel", "parallel", "arbitrary"),
            vmem_limit_bytes=vmem_limit,
        ),
    )(scale, x_pad, wq_t, bias2d)

    out = out[:M, :out_features]
    return out.reshape(*lead, out_features)


class MaskedFakeQuantizedLinear:
    """JAX/Pallas equivalent of MaskedFakeQuantizedWeightsFullyConnectedLayer."""

    def __init__(self, weight, bias=None, activation_bits: int = 8,
                 weights_bits: int = 8, sparse_n: int = 4, sparse_m: int = 2,
                 chunk_size: int = -1):
        assert chunk_size == -1, "only per-tensor weight quantization supported"
        assert activation_bits <= 8 and weights_bits <= 8, \
            "int8 code storage requires <= 8-bit quantization"
        out_f, in_f = weight.shape
        self.in_features, self.out_features = in_f, out_f
        self.activation_bits = activation_bits

        # --- one-time prep (static w.r.t. the forward pass) ---
        self.mask = _mask_nxm(jnp.abs(weight), sparse_n, sparse_m)
        w_masked = weight.astype(jnp.float32) * self.mask
        codes, self.w_scale = _fake_quant_codes(w_masked, weights_bits)

        # Lane-aligned padding only (multiples of 128); tile sizes are picked
        # per call so they always divide the padded dims with near-zero waste.
        Kp = _round_up(in_f, 128)
        Np = _round_up(out_f, 128)
        wq_t = jnp.pad(codes.T, ((0, Kp - in_f), (0, Np - out_f)))
        self.wq_t = wq_t.astype(jnp.int8)                  # exact for <=8-bit codes

        b = bias if bias is not None else jnp.zeros((out_f,), jnp.float32)
        self.bias2d = jnp.pad(b.astype(jnp.float32), (0, Np - out_f)).reshape(1, Np)

        # Generation-aware compute path and VMEM budget.
        gen = _tpu_generation()
        self.use_int_mxu = gen in ("v5", "v6")             # int8 MXU path
        if gen == "v7":
            self.vmem_limit = 40 * 1024 * 1024             # 64 MiB physical/TC
        elif gen in ("v5", "v6"):
            self.vmem_limit = 64 * 1024 * 1024             # 128 MiB physical
        else:
            self.vmem_limit = 32 * 1024 * 1024             # conservative default

    def __call__(self, x):
        return _masked_fq_forward(x, self.wq_t, self.w_scale, self.bias2d,
                                  self.out_features, self.activation_bits,
                                  self.use_int_mxu, self.vmem_limit)


if __name__ == "__main__":
    # Module shapes: weight (out_features, in_features); input (..., in_features)
    B, S, IN_F, OUT_F = 2, 8, 32, 48
    SPARSE_N, SPARSE_M = 4, 2
    A_BITS = W_BITS = 8

    key = jax.random.PRNGKey(0)
    kx, kw, kb = jax.random.split(key, 3)
    x = jax.random.normal(kx, (B, S, IN_F), jnp.float32)
    weight = jax.random.normal(kw, (OUT_F, IN_F), jnp.float32) * 0.1
    bias = jax.random.normal(kb, (OUT_F,), jnp.float32) * 0.05

    layer = MaskedFakeQuantizedLinear(weight, bias, activation_bits=A_BITS,
                                      weights_bits=W_BITS,
                                      sparse_n=SPARSE_N, sparse_m=SPARSE_M)
    out = layer(x)
    jax.block_until_ready(out)
    assert out.shape == (B, S, OUT_F)

    # --- pure-JAX reference of the torch forward (same math, unfused) ---
    qa = float(2 ** A_BITS)
    xs = 2.0 * jnp.max(jnp.abs(x)) / qa
    x_fq = jnp.clip(jnp.round(x / xs), -qa / 2.0, qa / 2.0 - 1.0) * xs
    wm = weight * layer.mask
    qw = float(2 ** W_BITS)
    ws = 2.0 * jnp.max(jnp.abs(wm)) / qw
    w_fq = jnp.clip(jnp.round(wm / ws), -qw / 2.0, qw / 2.0 - 1.0) * ws
    ref = jnp.einsum("bsk,nk->bsn", x_fq, w_fq) + bias

    assert jnp.allclose(out, ref, atol=1e-2, rtol=1e-2), (
        float(jnp.max(jnp.abs(out - ref))))
    print("KERNEL_OK")
</pallas_src>

<mosaic_0001>
module attributes {stable_mosaic.version = 11 : i64} {
  func.func @_code_matmul_kernel(%arg0: i32, %arg1: i32, %arg2: i32, %arg3: memref<1xf32, #tpu.memory_space<smem>>, %arg4: memref<32x128xi8, #tpu.memory_space<vmem>>, %arg5: memref<128x128xi8, #tpu.memory_space<vmem>>, %arg6: memref<1x128xf32, #tpu.memory_space<vmem>>, %arg7: memref<32x128xf32, #tpu.memory_space<vmem>>, %arg8: memref<32x128xf32, #tpu.memory_space<vmem>>) attributes {dimension_semantics = [#tpu.dimension_semantics<parallel>, #tpu.dimension_semantics<parallel>, #tpu.dimension_semantics<arbitrary>], iteration_bounds = array<i64: 1, 1, 1>, scalar_prefetch = 0 : i64, scratch_operands = 1 : i64, tpu.core_type = #tpu.core_type<tc>, window_params = [{transform_indices = @transform_0, window_bounds = array<i64: 1>}, {transform_indices = @transform_1, window_bounds = array<i64: 32, 128>}, {transform_indices = @transform_2, window_bounds = array<i64: 128, 128>}, {transform_indices = @transform_3, window_bounds = array<i64: 1, 128>}, {transform_indices = @transform_4, window_bounds = array<i64: 32, 128>}]} {
    %c0_i32 = arith.constant 0 : i32
    %0 = arith.cmpi eq, %arg2, %c0_i32 : i32
    %1 = arith.extui %0 : i1 to i32
    %c0_i32_0 = arith.constant 0 : i32
    %2 = arith.cmpi ne, %1, %c0_i32_0 : i32
    scf.if %2 {
      %cst_10 = arith.constant 0.000000e+00 : f32
      %14 = vector.broadcast %cst_10 : f32 to vector<32x128xf32>
      %c0_11 = arith.constant 0 : index
      %c0_12 = arith.constant 0 : index
      %15 = vector.load %arg8[%c0_11, %c0_12] : memref<32x128xf32, #tpu.memory_space<vmem>>, vector<32x128xf32>
      tpu.vector_store %arg8[%c0_11, %c0_12], %14 {strides = array<i32>} : memref<32x128xf32, #tpu.memory_space<vmem>>, vector<32x128xf32>,
    } else {
    }
    %c0 = arith.constant 0 : index
    %c0_1 = arith.constant 0 : index
    %3 = vector.load %arg8[%c0, %c0_1] : memref<32x128xf32, #tpu.memory_space<vmem>>, vector<32x128xf32>
    %c0_2 = arith.constant 0 : index
    %c0_3 = arith.constant 0 : index
    %4 = vector.load %arg4[%c0_2, %c0_3] : memref<32x128xi8, #tpu.memory_space<vmem>>, vector<32x128xi8>
    %5 = arith.sitofp %4 : vector<32x128xi8> to vector<32x128xbf16>
    %c0_4 = arith.constant 0 : index
    %c0_5 = arith.constant 0 : index
    %6 = vector.load %arg5[%c0_4, %c0_5] : memref<128x128xi8, #tpu.memory_space<vmem>>, vector<128x128xi8>
    %7 = arith.sitofp %6 : vector<128x128xi8> to vector<128x128xbf16>
    %cst = arith.constant dense<0.000000e+00> : vector<32x128xf32>
    %8 = tpu.matmul %5, %7, %cst {dimension_numbers = #tpu.dot_dimension_numbers<[1], [0], [0], [1], [0, 0, 1, 1], [], []>} : vector<32x128xbf16>, vector<128x128xbf16>, vector<32x128xf32> -> vector<32x128xf32>
    %9 = arith.addf %3, %8 : vector<32x128xf32>
    %c0_6 = arith.constant 0 : index
    %c0_7 = arith.constant 0 : index
    %10 = vector.load %arg8[%c0_6, %c0_7] : memref<32x128xf32, #tpu.memory_space<vmem>>, vector<32x128xf32>
    tpu.vector_store %arg8[%c0_6, %c0_7], %9 {strides = array<i32>} : memref<32x128xf32, #tpu.memory_space<vmem>>, vector<32x128xf32>,
    %c0_i32_8 = arith.constant 0 : i32
    %11 = arith.cmpi eq, %arg2, %c0_i32_8 : i32
    %12 = arith.extui %11 : i1 to i32
    %c0_i32_9 = arith.constant 0 : i32
    %13 = arith.cmpi ne, %12, %c0_i32_9 : i32
    scf.if %13 {
      %c0_10 = arith.constant 0 : index
      %c0_11 = arith.constant 0 : index
      %14 = vector.load %arg8[%c0_10, %c0_11] : memref<32x128xf32, #tpu.memory_space<vmem>>, vector<32x128xf32>
      %c0_12 = arith.constant 0 : index
      %15 = memref.load %arg3[%c0_12] : memref<1xf32, #tpu.memory_space<smem>>
      %16 = vector.broadcast %15 : f32 to vector<32x128xf32>
      %17 = arith.mulf %14, %16 : vector<32x128xf32>
      %c0_13 = arith.constant 0 : index
      %c0_14 = arith.constant 0 : index
      %18 = vector.load %arg6[%c0_13, %c0_14] : memref<1x128xf32, #tpu.memory_space<vmem>>, vector<1x128xf32>
      %19 = vector.broadcast %18 : vector<1x128xf32> to vector<32x128xf32>
      %20 = arith.addf %17, %19 : vector<32x128xf32>
      %c0_15 = arith.constant 0 : index
      %c0_16 = arith.constant 0 : index
      %21 = vector.load %arg7[%c0_15, %c0_16] : memref<32x128xf32, #tpu.memory_space<vmem>>, vector<32x128xf32>
      tpu.vector_store %arg7[%c0_15, %c0_16], %20 {strides = array<i32>} : memref<32x128xf32, #tpu.memory_space<vmem>>, vector<32x128xf32>,
    } else {
    }
    return
  }
  func.func @transform_0(%arg0: i32, %arg1: i32, %arg2: i32) -> i32 {
    %c0_i32 = arith.constant 0 : i32
    %c0_i32_0 = arith.constant 0 : i32
    return %c0_i32 : i32
  }
  func.func @transform_1(%arg0: i32, %arg1: i32, %arg2: i32) -> (i32, i32) {
    %c0_i32 = arith.constant 0 : i32
    return %arg0, %arg2 : i32, i32
  }
  func.func @transform_2(%arg0: i32, %arg1: i32, %arg2: i32) -> (i32, i32) {
    %c0_i32 = arith.constant 0 : i32
    return %arg2, %arg1 : i32, i32
  }
  func.func @transform_3(%arg0: i32, %arg1: i32, %arg2: i32) -> (i32, i32) {
    %c0_i32 = arith.constant 0 : i32
    %c0_i32_0 = arith.constant 0 : i32
    return %c0_i32, %arg1 : i32, i32
  }
  func.func @transform_4(%arg0: i32, %arg1: i32, %arg2: i32) -> (i32, i32) {
    %c0_i32 = arith.constant 0 : i32
    return %arg0, %arg1 : i32, i32
  }
}

</mosaic_0001>

<llo_original>
// kernel: _masked_fq_forward.1
$region0: #{_masked_fq_forward.1}
  #allocation0 [shape = 'u32[]', space=smem, size = 0x4, offset = 0x4, fixed_abs, tag = 'smem constant byte address 0x4 - core index']
  #allocation1 [shape = 'u32[144,128]{1,0:T(1,128)}', space=vmem, size = 0x12000, scoped, tag = 'internal scratch']
  #allocation2 [shape = 'f32[32,128]{1,0:T(8,128)}', space=vmem, size = 0x4000, scoped, tag = 'scratch operand']
  #allocation3 [shape = 'f32[1]{0:T(128)S(6)}', space=smem, size = 0x200, scoped, tag = 'scoped memory for _masked_fq_forward.1']
  %s0 = inlined_call_operand.<no memory space> [shape: f32[1], index: 0, kind: input, shape index: {}]
  %s1 = inlined_call_operand.vmem [shape: s8[32,128], index: 1, kind: input, shape index: {}]
  %s2 = inlined_call_operand.vmem [shape: s8[128,128], index: 2, kind: input, shape index: {}]
  %s3 = inlined_call_operand.vmem [shape: f32[1,128], index: 3, kind: input, shape index: {}]
  %s4 = inlined_call_operand.vmem [shape: f32[32,128], index: 4, kind: output, shape index: {}]
  %s5 = sld [smem:[#allocation0]]
  $region34: #{_masked_fq_forward.1} parent=0
    _
  %s7 = ssub.s32 1, %s5
  %s8 = scalar_select 0, %s7, %s5
  %9 = sst [smem:[#allocation3]] %s0
  // Predicated region
  $region2: #{_masked_fq_forward.1} parent=0 // pred_check
    _
  $region3: #{_masked_fq_forward.1} parent=0 // pred_check_branch
    %11 = sbr.rel (0) target = $region5
  $region4: #{_masked_fq_forward.1} parent=0 // pred_region
    _
  $region5: #{_masked_fq_forward.1} parent=0 // pred_fallthru
    _
  // Predicated region
  $region6: #{_masked_fq_forward.1} parent=0 // pred_check
    _
  $region7: #{_masked_fq_forward.1} parent=0 // pred_check_branch
    %13 = sbr.rel (0) target = $region9
  $region8: #{_masked_fq_forward.1} parent=0 // pred_region
    _
  $region9: #{_masked_fq_forward.1} parent=0 // pred_fallthru
    _
  // Predicated region
  $region10: #{_masked_fq_forward.1} parent=0 // pred_check
    _
  $region11: #{_masked_fq_forward.1} parent=0 // pred_check_branch
    %15 = sbr.rel (0) target = $region13
  $region12: #{_masked_fq_forward.1} parent=0 // pred_region
    _
  $region13: #{_masked_fq_forward.1} parent=0 // pred_fallthru
    _
  // Predicated region
  $region14: #{_masked_fq_forward.1} parent=0 // pred_check
    _
  $region15: #{_masked_fq_forward.1} parent=0 // pred_check_branch
    %17 = sbr.rel (0) target = $region17
  $region16: #{_masked_fq_forward.1} parent=0 // pred_region
    _
  $region17: #{_masked_fq_forward.1} parent=0 // pred_fallthru
    _
  %p19 = scmp.eq.s32.totalorder 0, 0
  // Predicated region
  $region18: #{_masked_fq_forward.1} parent=0 // pred_check
    %p20 = pneg %p19
  $region19: #{_masked_fq_forward.1} parent=0 // pred_check_branch
    %22 = sbr.rel (%p20) target = $region21
  $region20: #{_masked_fq_forward.1} parent=0 // pred_region
    %23 = vst [vmem:[#allocation2] sm:$0xff] 0.0
    %24 = vst [vmem:[#allocation2 + $0x8] sm:$0xff] 0.0
    %25 = vst [vmem:[#allocation2 + $0x10] sm:$0xff] 0.0
    %26 = vst [vmem:[#allocation2 + $0x18] sm:$0xff] 0.0
  $region21: #{_masked_fq_forward.1} parent=0 // pred_fallthru
    _
  %v27 = vld [vmem:[#allocation2] sm:$0xff]
  %v28 = vld [vmem:[#allocation2 + $0x8] sm:$0xff]
  %v29 = vld [vmem:[#allocation2 + $0x10] sm:$0xff]
  %v30 = vld [vmem:[#allocation2 + $0x18] sm:$0xff]
  %v31 = vld [vmem:[%s1] sm:$0xff]
  %v32 = vunpack.c.l.s8.bf16 %v31
  %v33 = vunpack.c.h.s8.bf16 %v31
  %v34 = vld [vmem:[%s2] sm:$0xff]
  %v35 = vld [vmem:[%s2 + $0x8] sm:$0xff]
  %v36 = vld [vmem:[%s2 + $0x10] sm:$0xff]
  %v37 = vld [vmem:[%s2 + $0x18] sm:$0xff]
  %v38 = vunpack.c.l.s8.bf16 %v34
  %v39 = vunpack.c.h.s8.bf16 %v34
  %v40 = vunpack.c.l.s8.bf16 %v35
  %v41 = vunpack.c.h.s8.bf16 %v35
  %v42 = vunpack.c.l.s8.bf16 %v36
  %v43 = vunpack.c.h.s8.bf16 %v36
  %v44 = vunpack.c.l.s8.bf16 %v37
  %v45 = vunpack.c.h.s8.bf16 %v37
  %46 = vmatprep.subr.bf16.mxu0 0
  %47 = vmatpush1.bf16.msra.mxu0 %v38
  %48 = vmatprep.subr.bf16.mxu0 0
  %49 = vmatpush1.bf16.msra.mxu0 %v39
  %50 = vmatprep.subr.bf16.mxu0 0
  %51 = vmatpush1.bf16.msra.mxu0 %v40
  %52 = vmatprep.subr.bf16.mxu0 0
  %53 = vmatpush1.bf16.msra.mxu0 %v41
  %54 = vmatprep.subr.bf16.mxu0 0
  %55 = vmatpush1.bf16.msra.mxu0 %v42
  %56 = vmatprep.subr.bf16.mxu0 0
  %57 = vmatpush1.bf16.msra.mxu0 %v43
  %58 = vmatprep.subr.bf16.mxu0 0
  %59 = vmatpush1.bf16.msra.mxu0 %v44
  %60 = vmatprep.subr.bf16.mxu0 0
  %61 = vmatpush1.bf16.msra.mxu0 %v45
  %62 = vmatprep.subr.bf16.mxu0 0
  %63 = vmatpush1.bf16.msra.mxu0 0
  %64 = vmatprep.subr.bf16.mxu0 0
  %65 = vmatpush1.bf16.msra.mxu0 0
  %66 = vmatprep.subr.bf16.mxu0 0
  %67 = vmatpush1.bf16.msra.mxu0 0
  %68 = vmatprep.subr.bf16.mxu0 0
  %69 = vmatpush1.bf16.msra.mxu0 0
  %70 = vmatprep.subr.bf16.mxu0 0
  %71 = vmatpush1.bf16.msra.mxu0 0
  %72 = vmatprep.subr.bf16.mxu0 0
  %73 = vmatpush1.bf16.msra.mxu0 0
  %74 = vmatprep.subr.bf16.mxu0 0
  %75 = vmatpush1.bf16.msra.mxu0 0
  %76 = vmatprep.subr.bf16.mxu0 0
  %77 = vmatpush1.bf16.msra.mxu0 0
  %78 = vmatprep.mubr.bf16.mxu0 0
  %79 = vmatmul.mubr.bf16.gmra.mrb[0].mxu0 %v32
  %v80 = vpop.f32.mrb[0].mxu0
  %v81 = vadd.f32 0.0, %v80
  %v82 = vpop.f32.mrb[0].mxu0
  %v83 = vpop.f32.mrb[0].mxu0
  %v84 = vadd.f32 0.0, %v83
  %v85 = vpop.f32.mrb[0].mxu0
  %86 = vmatprep.mubr.bf16.mxu0 0
  %87 = vmatmul.mubr.bf16.gmra.mrb[0].mxu0 %v33
  %v88 = vpop.f32.mrb[0].mxu0
  %v89 = vadd.f32 0.0, %v88
  %v90 = vpop.f32.mrb[0].mxu0
  %v91 = vpop.f32.mrb[0].mxu0
  %v92 = vadd.f32 0.0, %v91
  %v93 = vpop.f32.mrb[0].mxu0
  %94 = vdwg.mxu0
  %v95 = vadd.f32 %v27, %v81
  %v96 = vadd.f32 %v28, %v84
  %v97 = vadd.f32 %v29, %v89
  %v98 = vadd.f32 %v30, %v92
  %99 = vst [vmem:[#allocation2] sm:$0xff] %v95
  %100 = vst [vmem:[#allocation2 + $0x8] sm:$0xff] %v96
  %101 = vst [vmem:[#allocation2 + $0x10] sm:$0xff] %v97
  %102 = vst [vmem:[#allocation2 + $0x18] sm:$0xff] %v98
  // Predicated region
  $region22: #{_masked_fq_forward.1} parent=0 // pred_check
    %p103 = pneg %p19
  $region23: #{_masked_fq_forward.1} parent=0 // pred_check_branch
    %105 = sbr.rel (%p103) target = $region25
  $region24: #{_masked_fq_forward.1} parent=0 // pred_region
    %v106 = vld [vmem:[#allocation2] sm:$0xff]
    %v107 = vld [vmem:[#allocation2 + $0x8] sm:$0xff]
    %v108 = vld [vmem:[#allocation2 + $0x10] sm:$0xff]
    %v109 = vld [vmem:[#allocation2 + $0x18] sm:$0xff]
    %s110 = sld [smem:[#allocation3]]
    %v111 = vstv %s110
    %v112 = vmul.f32 %v106, %v111
    %v113 = vmul.f32 %v107, %v111
    %v114 = vmul.f32 %v108, %v111
    %v115 = vmul.f32 %v109, %v111
    %v116 = vld [vmem:[%s3] sm:$0x1]
    %v118 = vlaneseq
    %v119 = vshrl.u32 %v118, 7
    %v120 = vsub.s32 0, %v119
    %v121 = vrot.slane %v116, %v120
    %v123 = vadd.f32 %v112, %v121
    %v124 = vadd.f32 %v113, %v121
    %v125 = vadd.f32 %v114, %v121
    %v126 = vadd.f32 %v115, %v121
    %127 = vst [vmem:[%s4] sm:$0xff] %v123
    %128 = vst [vmem:[%s4 + $0x8] sm:$0xff] %v124
    %129 = vst [vmem:[%s4 + $0x10] sm:$0xff] %v125
    %130 = vst [vmem:[%s4 + $0x18] sm:$0xff] %v126
  $region25: #{_masked_fq_forward.1} parent=0 // pred_fallthru
    _
  // Predicated region
  $region26: #{_masked_fq_forward.1} parent=0 // pred_check
    _
  $region27: #{_masked_fq_forward.1} parent=0 // pred_check_branch
    %132 = sbr.rel (0) target = $region29
  $region28: #{_masked_fq_forward.1} parent=0 // pred_region
    _
  $region29: #{_masked_fq_forward.1} parent=0 // pred_fallthru
    _
  // Predicated region
  $region30: #{_masked_fq_forward.1} parent=0 // pred_check
    _
  $region31: #{_masked_fq_forward.1} parent=0 // pred_check_branch
    %134 = sbr.rel (0) target = $region33
  $region32: #{_masked_fq_forward.1} parent=0 // pred_region
    _
  $region33: #{_masked_fq_forward.1} parent=0 // pred_fallthru
    _

</llo_original>
